<compile_context>
chip_gen: v6e
topology: v6e:2x2x1
jax: 0.10.0
libtpu: 0.0.40
codegen_flags: <defaults>
</compile_context>

<pallas_src>
import functools

import jax
import jax.numpy as jnp
from jax.experimental import pallas as pl
from jax.experimental.pallas import tpu as pltpu

IGNORE_INDEX = 255


def _ce_kernel(logits_ref, labels_ref, sum_ref, cnt_ref, *, hw):
    # logits_ref: (C, TILE) float  (N squeezed out; pixels on lanes)
    # labels_ref: (1, TILE) int32
    # sum_ref, cnt_ref: (1, TILE) float32 lane-vector accumulators, resident
    # across the whole grid (same output block for every grid point).
    @pl.when((pl.program_id(0) == 0) & (pl.program_id(1) == 0))
    def _():
        sum_ref[...] = jnp.zeros_like(sum_ref)
        cnt_ref[...] = jnp.zeros_like(cnt_ref)

    logits = logits_ref[...].astype(jnp.float32)            # (C, TILE)
    labels = labels_ref[...]                                 # (1, TILE)
    tile = logits.shape[1]

    # numerically stable log-sum-exp over the (small, leading) class axis
    m = jnp.max(logits, axis=0, keepdims=True)               # (1, TILE)
    lse = m + jnp.log(jnp.sum(jnp.exp(logits - m), axis=0, keepdims=True))

    # pick the logit of the target class via broadcast-compare + select
    class_ids = jax.lax.broadcasted_iota(jnp.int32, logits.shape, 0)
    picked = jnp.sum(jnp.where(class_ids == labels, logits, 0.0),
                     axis=0, keepdims=True)                  # (1, TILE)

    per_pixel_ce = lse - picked                              # (1, TILE)

    # validity mask: not ignore_index AND inside the real pixel range
    # (the last tile along HW may be a padded/garbage block).
    pix = pl.program_id(1) * tile + jax.lax.broadcasted_iota(
        jnp.int32, (1, tile), 1)
    valid = jnp.logical_and(labels != IGNORE_INDEX, pix < hw)

    sum_ref[...] += jnp.where(valid, per_pixel_ce, 0.0)
    cnt_ref[...] += jnp.where(valid, 1.0, 0.0)


@functools.partial(jax.jit, static_argnames=("alpha", "gamma"))
def multiclass_focal_loss(preds, labels, alpha=0.5, gamma=2):
    """preds: (N, C, H, W) float logits (NCHW, as in PyTorch).
    labels: (N, H, W) int class indices, 255 = ignore.
    Returns scalar focal loss (float32)."""
    N, C, H, W = preds.shape
    HW = H * W

    # Free reshapes only -- no transpose, no pad (both are extra HBM passes).
    logits3d = preds.reshape(N, C, HW)                 # (N, C, HW)
    labels3d = labels.reshape(N, 1, HW).astype(jnp.int32)

    # Tile the pixel (lane) axis.  Budget ~4 MiB per logits block so the
    # double-buffered pipeline fits comfortably inside even v5e's 16 MiB
    # default scoped-VMEM limit; cap at 8192 lanes.
    bytes_per = jnp.dtype(preds.dtype).itemsize
    budget = 4 * 1024 * 1024
    tile_cap = max(128, (budget // (C * bytes_per)) // 128 * 128)
    max_tile = min(8192, tile_cap)
    TILE = HW if HW <= max_tile else max_tile          # multiple of 128 or == HW
    grid_hw = pl.cdiv(HW, TILE)

    kernel = functools.partial(_ce_kernel, hw=HW)

    sum_slab, cnt_slab = pl.pallas_call(
        kernel,
        out_shape=(jax.ShapeDtypeStruct((1, TILE), jnp.float32),
                   jax.ShapeDtypeStruct((1, TILE), jnp.float32)),
        grid_spec=pltpu.PrefetchScalarGridSpec(
            num_scalar_prefetch=0,
            grid=(N, grid_hw),
            in_specs=[
                # kernel sees (C, TILE): classes on sublanes, pixels on lanes
                pl.BlockSpec((None, C, TILE), lambda n, j: (n, 0, j)),
                # kernel sees (1, TILE): lane-dense label row
                pl.BlockSpec((None, 1, TILE), lambda n, j: (n, 0, j)),
            ],
            out_specs=[
                # same block for every grid point -> resident accumulators
                pl.BlockSpec((1, TILE), lambda n, j: (0, 0)),
                pl.BlockSpec((1, TILE), lambda n, j: (0, 0)),
            ],
        ),
        compiler_params=pltpu.CompilerParams(
            dimension_semantics=("arbitrary", "arbitrary")),
    )(logits3d, labels3d)

    # Final tiny reductions + scalar focal transform in plain JAX.
    sum_loss = jnp.sum(sum_slab)
    count = jnp.sum(cnt_slab)

    # nn.CrossEntropyLoss(reduction='mean', ignore_index=255): mean over valid
    # pixels.  (count == 0 yields NaN, matching PyTorch semantics.)
    ce = sum_loss / count
    logpt = -ce
    pt = jnp.exp(logpt)
    loss = -((1.0 - pt) ** gamma) * alpha * logpt
    return loss


def _reference(preds, labels, alpha=0.5, gamma=2):
    # pure-JAX reference for sanity checking
    N, C, H, W = preds.shape
    x = jnp.transpose(preds, (0, 2, 3, 1)).reshape(-1, C).astype(jnp.float32)
    y = labels.reshape(-1).astype(jnp.int32)
    logp = jax.nn.log_softmax(x, axis=-1)
    picked = jnp.take_along_axis(logp, jnp.clip(y, 0, C - 1)[:, None],
                                 axis=-1)[:, 0]
    valid = (y != IGNORE_INDEX).astype(jnp.float32)
    ce = -(jnp.sum(picked * valid) / jnp.sum(valid))
    logpt = -ce
    pt = jnp.exp(logpt)
    return -((1.0 - pt) ** gamma) * alpha * logpt


if __name__ == "__main__":
    key = jax.random.PRNGKey(0)
    k1, k2, k3 = jax.random.split(key, 3)

    N, C, H, W = 2, 4, 16, 16
    preds = jax.random.normal(k1, (N, C, H, W), dtype=jnp.float32)
    labels = jax.random.randint(k2, (N, H, W), 0, C, dtype=jnp.int32)
    # sprinkle some ignore_index pixels
    ignore_mask = jax.random.bernoulli(k3, 0.1, (N, H, W))
    labels = jnp.where(ignore_mask, IGNORE_INDEX, labels)

    out = multiclass_focal_loss(preds, labels, alpha=0.5, gamma=2)
    out = jax.block_until_ready(out)

    ref = _reference(preds, labels, alpha=0.5, gamma=2)
    assert jnp.allclose(out, ref, rtol=1e-5, atol=1e-6), (out, ref)

    print("KERNEL_OK")
</pallas_src>

<mosaic_0001>
module attributes {stable_mosaic.version = 11 : i64} {
  func.func @_ce_kernel(%arg0: i32, %arg1: i32, %arg2: memref<1x4x256xf32, #tpu.memory_space<vmem>>, %arg3: memref<1x1x256xi32, #tpu.memory_space<vmem>>, %arg4: memref<1x256xf32, #tpu.memory_space<vmem>>, %arg5: memref<1x256xf32, #tpu.memory_space<vmem>>) attributes {dimension_semantics = [#tpu.dimension_semantics<arbitrary>, #tpu.dimension_semantics<arbitrary>], iteration_bounds = array<i64: 2, 1>, scalar_prefetch = 0 : i64, scratch_operands = 0 : i64, tpu.core_type = #tpu.core_type<tc>, window_params = [{transform_indices = @transform_0, window_bounds = array<i64: 1, 4, 256>}, {transform_indices = @transform_1, window_bounds = array<i64: 1, 1, 256>}, {pipeline_mode = #tpu.pipeline_mode<synchronous>, transform_indices = @transform_2, window_bounds = array<i64: 1, 256>}, {pipeline_mode = #tpu.pipeline_mode<synchronous>, transform_indices = @transform_3, window_bounds = array<i64: 1, 256>}]} {
    %c0_i32 = arith.constant 0 : i32
    %0 = arith.cmpi eq, %arg0, %c0_i32 : i32
    %c0_i32_0 = arith.constant 0 : i32
    %1 = arith.cmpi eq, %arg1, %c0_i32_0 : i32
    %2 = arith.andi %0, %1 : i1
    %3 = arith.extui %2 : i1 to i32
    %c0_i32_1 = arith.constant 0 : i32
    %4 = arith.cmpi ne, %3, %c0_i32_1 : i32
    scf.if %4 {
      %cst_22 = arith.constant 0.000000e+00 : f32
      %46 = vector.broadcast %cst_22 : f32 to vector<1x256xf32>
      %c0_23 = arith.constant 0 : index
      %c0_24 = arith.constant 0 : index
      %47 = vector.load %arg4[%c0_23, %c0_24] : memref<1x256xf32, #tpu.memory_space<vmem>>, vector<1x256xf32>
      tpu.vector_store %arg4[%c0_23, %c0_24], %46 {strides = array<i32>} : memref<1x256xf32, #tpu.memory_space<vmem>>, vector<1x256xf32>,
      %cst_25 = arith.constant 0.000000e+00 : f32
      %48 = vector.broadcast %cst_25 : f32 to vector<1x256xf32>
      %c0_26 = arith.constant 0 : index
      %c0_27 = arith.constant 0 : index
      %49 = vector.load %arg5[%c0_26, %c0_27] : memref<1x256xf32, #tpu.memory_space<vmem>>, vector<1x256xf32>
      tpu.vector_store %arg5[%c0_26, %c0_27], %48 {strides = array<i32>} : memref<1x256xf32, #tpu.memory_space<vmem>>, vector<1x256xf32>,
    } else {
    }
    %c0 = arith.constant 0 : index
    %c0_2 = arith.constant 0 : index
    %c0_3 = arith.constant 0 : index
    %5 = vector.load %arg2[%c0, %c0_2, %c0_3] : memref<1x4x256xf32, #tpu.memory_space<vmem>>, vector<1x4x256xf32>
    %6 = vector.shape_cast %5 : vector<1x4x256xf32> to vector<4x256xf32>
    %c0_4 = arith.constant 0 : index
    %c0_5 = arith.constant 0 : index
    %c0_6 = arith.constant 0 : index
    %7 = vector.load %arg3[%c0_4, %c0_5, %c0_6] : memref<1x1x256xi32, #tpu.memory_space<vmem>>, vector<1x1x256xi32>
    %8 = vector.shape_cast %7 : vector<1x1x256xi32> to vector<1x256xi32>
    %cst = arith.constant dense<0xFF800000> : vector<256xf32>
    %9 = vector.multi_reduction <maximumf>, %6, %cst [0] : vector<4x256xf32> to vector<256xf32>
    %10 = vector.shape_cast %9 : vector<256xf32> to vector<1x256xf32>
    %11 = vector.broadcast %10 : vector<1x256xf32> to vector<4x256xf32>
    %12 = arith.subf %6, %11 : vector<4x256xf32>
    %13 = math.exp %12 : vector<4x256xf32>
    %cst_7 = arith.constant dense<0.000000e+00> : vector<256xf32>
    %14 = vector.multi_reduction <add>, %13, %cst_7 [0] : vector<4x256xf32> to vector<256xf32>
    %15 = vector.shape_cast %14 : vector<256xf32> to vector<1x256xf32>
    %16 = math.log %15 : vector<1x256xf32>
    %17 = arith.addf %10, %16 : vector<1x256xf32>
    %18 = tpu.iota {dimensions = array<i32: 0>} : vector<4x256xi32>
    %19 = vector.broadcast %8 : vector<1x256xi32> to vector<4x256xi32>
    %20 = arith.cmpi eq, %18, %19 : vector<4x256xi32>
    %cst_8 = arith.constant 0.000000e+00 : f32
    %21 = vector.broadcast %cst_8 : f32 to vector<4x256xf32>
    %22 = arith.select %20, %6, %21 : vector<4x256xi1>, vector<4x256xf32>
    %cst_9 = arith.constant dense<0.000000e+00> : vector<256xf32>
    %23 = vector.multi_reduction <add>, %22, %cst_9 [0] : vector<4x256xf32> to vector<256xf32>
    %24 = vector.shape_cast %23 : vector<256xf32> to vector<1x256xf32>
    %25 = arith.subf %17, %24 : vector<1x256xf32>
    %c256_i32 = arith.constant 256 : i32
    %26 = arith.muli %arg1, %c256_i32 : i32
    %27 = tpu.iota {dimensions = array<i32: 1>} : vector<1x256xi32>
    %28 = vector.broadcast %26 : i32 to vector<1x256xi32>
    %29 = arith.addi %28, %27 : vector<1x256xi32>
    %c255_i32 = arith.constant 255 : i32
    %30 = vector.broadcast %c255_i32 : i32 to vector<1x256xi32>
    %31 = arith.cmpi ne, %8, %30 : vector<1x256xi32>
    %c256_i32_10 = arith.constant 256 : i32
    %32 = vector.broadcast %c256_i32_10 : i32 to vector<1x256xi32>
    %33 = arith.cmpi slt, %29, %32 : vector<1x256xi32>
    %34 = arith.andi %31, %33 : vector<1x256xi1>
    %c0_11 = arith.constant 0 : index
    %c0_12 = arith.constant 0 : index
    %35 = vector.load %arg4[%c0_11, %c0_12] : memref<1x256xf32, #tpu.memory_space<vmem>>, vector<1x256xf32>
    %cst_13 = arith.constant 0.000000e+00 : f32
    %36 = vector.broadcast %cst_13 : f32 to vector<1x256xf32>
    %37 = arith.select %34, %25, %36 : vector<1x256xi1>, vector<1x256xf32>
    %38 = arith.addf %35, %37 : vector<1x256xf32>
    %c0_14 = arith.constant 0 : index
    %c0_15 = arith.constant 0 : index
    %39 = vector.load %arg4[%c0_14, %c0_15] : memref<1x256xf32, #tpu.memory_space<vmem>>, vector<1x256xf32>
    tpu.vector_store %arg4[%c0_14, %c0_15], %38 {strides = array<i32>} : memref<1x256xf32, #tpu.memory_space<vmem>>, vector<1x256xf32>,
    %c0_16 = arith.constant 0 : index
    %c0_17 = arith.constant 0 : index
    %40 = vector.load %arg5[%c0_16, %c0_17] : memref<1x256xf32, #tpu.memory_space<vmem>>, vector<1x256xf32>
    %cst_18 = arith.constant 1.000000e+00 : f32
    %cst_19 = arith.constant 0.000000e+00 : f32
    %41 = vector.broadcast %cst_18 : f32 to vector<1x256xf32>
    %42 = vector.broadcast %cst_19 : f32 to vector<1x256xf32>
    %43 = arith.select %34, %41, %42 : vector<1x256xi1>, vector<1x256xf32>
    %44 = arith.addf %40, %43 : vector<1x256xf32>
    %c0_20 = arith.constant 0 : index
    %c0_21 = arith.constant 0 : index
    %45 = vector.load %arg5[%c0_20, %c0_21] : memref<1x256xf32, #tpu.memory_space<vmem>>, vector<1x256xf32>
    tpu.vector_store %arg5[%c0_20, %c0_21], %44 {strides = array<i32>} : memref<1x256xf32, #tpu.memory_space<vmem>>, vector<1x256xf32>,
    return
  }
  func.func @transform_0(%arg0: i32, %arg1: i32) -> (i32, i32, i32) {
    %c0_i32 = arith.constant 0 : i32
    %c0_i32_0 = arith.constant 0 : i32
    return %arg0, %c0_i32, %arg1 : i32, i32, i32
  }
  func.func @transform_1(%arg0: i32, %arg1: i32) -> (i32, i32, i32) {
    %c0_i32 = arith.constant 0 : i32
    %c0_i32_0 = arith.constant 0 : i32
    return %arg0, %c0_i32, %arg1 : i32, i32, i32
  }
  func.func @transform_2(%arg0: i32, %arg1: i32) -> (i32, i32) {
    %c0_i32 = arith.constant 0 : i32
    %c0_i32_0 = arith.constant 0 : i32
    %c0_i32_1 = arith.constant 0 : i32
    return %c0_i32, %c0_i32_0 : i32, i32
  }
  func.func @transform_3(%arg0: i32, %arg1: i32) -> (i32, i32) {
    %c0_i32 = arith.constant 0 : i32
    %c0_i32_0 = arith.constant 0 : i32
    %c0_i32_1 = arith.constant 0 : i32
    return %c0_i32, %c0_i32_0 : i32, i32
  }
}

</mosaic_0001>

<llo_original>
// kernel: multiclass_focal_loss.1
$region0: #{multiclass_focal_loss.1}
  #allocation0 [shape = 'u32[]', space=smem, size = 0x4, offset = 0x4, fixed_abs, tag = 'smem constant byte address 0x4 - core index']
  #allocation1 [shape = 'u32[144,128]{1,0:T(1,128)}', space=vmem, size = 0x12000, scoped, tag = 'internal scratch']
  %s0 = inlined_call_operand.vmem [shape: f32[2,4,256], index: 0, kind: input, shape index: {}]
  %s1 = inlined_call_operand.vmem [shape: s32[2,1,256], index: 1, kind: input, shape index: {}]
  %s2 = inlined_call_operand.vmem [shape: f32[1,256], index: 2, kind: output, shape index: {0}]
  %s3 = inlined_call_operand.vmem [shape: f32[1,256], index: 3, kind: output, shape index: {1}]
  %4 = xla_tuple %s2, %s3
  %s5 = sld [smem:[#allocation0]]
  $region53: #{multiclass_focal_loss.1} parent=0
    _
  %s7 = ssub.s32 1, %s5
  %s8 = scalar_select 0, %s7, %s5
  loop: start=0, step=1, limit=4
  $region2: #{multiclass_focal_loss.1} parent=0 // loop_pre_header
    _
  $region3: #{multiclass_focal_loss.1} parent=0 // loop_header
    %s10 = sphi 0, %s14
    %p11 = scmp.ge.s32.totalorder %s10, 4
    %s17 = sphi 0, %s29
    %s18 = sphi 0, %s25
    %s19 = sphi 0, %s17
    %s20 = sphi 0, %s18
    %s21 = sphi 0, %s19
    %s22 = sphi 0, %s20
    %s34 = sphi 0, %s36
    %s37 = sphi 0, %s34
    %s38 = sphi 0, %s37
    %s54 = sphi 0, %s38
    %s62 = sphi 0, %s64
    %s65 = sphi 0, %s62
    %s66 = sphi 0, %s65
    %s82 = sphi 0, %s66
    %s86 = sphi 0, %s86
    %s88 = sphi 0, %s86
    %s89 = sphi 0, %s88
    %s103 = sphi 0, %s89
    %s107 = sphi 0, %s107
    %s109 = sphi 0, %s107
    %s110 = sphi 0, %s109
    %s124 = sphi 0, %s110
  $region4: #{multiclass_focal_loss.1} parent=0 // loop_header_branch
    %13 = sbr.rel (%p11) target = $region8
  $region5: #{multiclass_focal_loss.1} parent=0 // loop_body
    %s15 = ssub.s32 %s10, 1
    %s16 = ssub.s32 %s10, 2
    %s23 = sadd.s32 1, %s18
    %p24 = scmp.ge.s32.totalorder %s23, 1
    %s25 = scalar_select %p24, 0, %s23
    %s26 = sadd.s32 1, %s17
    %s27 = scalar_select %p24, %s26, %s17
    %p28 = scmp.ge.s32.totalorder %s27, 2
    %s29 = scalar_select %p28, 0, %s27
    %s30 = ssub.s32 %s17, %s29
    %s31 = ssub.s32 %s18, %s25
    %s32 = sor.u32 %s30, %s31
    %p33 = scmp.eq.s32.totalorder %s32, 0
    %s35 = sadd.s32 %s34, 1
    %s36 = scalar_select %p33, %s34, %s35
    %p39 = pneg %p33
    %p40 = scmp.eq.s32.totalorder %s10, 1
    %p41 = por %p39, %p40
    %p42 = scmp.ne.s32.totalorder %s34, %s37
    %p43 = scmp.eq.s32.totalorder %s10, 0
    %p44 = por %p42, %p43
    %p45 = scmp.ne.s32.totalorder %s34, %s37
    %p46 = scmp.eq.s32.totalorder %s15, 1
    %p47 = por %p45, %p46
    %p48 = scmp.ne.s32.totalorder %s37, %s38
    %p49 = scmp.eq.s32.totalorder %s15, 0
    %p50 = por %p48, %p49
    %p51 = scmp.ne.s32.totalorder %s37, %s38
    %p52 = scmp.eq.s32.totalorder %s16, 1
    %p53 = por %p51, %p52
    %p55 = scmp.ne.s32.totalorder %s38, %s54
    %p56 = scmp.eq.s32.totalorder %s16, 0
    %p57 = por %p55, %p56
    %s58 = ssub.s32 %s17, %s29
    %s59 = ssub.s32 %s18, %s25
    %s60 = sor.u32 %s58, %s59
    %p61 = scmp.eq.s32.totalorder %s60, 0
    %s63 = sadd.s32 %s62, 1
    %s64 = scalar_select %p61, %s62, %s63
    %p67 = pneg %p61
    %p68 = scmp.eq.s32.totalorder %s10, 1
    %p69 = por %p67, %p68
    %p70 = scmp.ne.s32.totalorder %s62, %s65
    %p71 = scmp.eq.s32.totalorder %s10, 0
    %p72 = por %p70, %p71
    %p73 = scmp.ne.s32.totalorder %s62, %s65
    %p74 = scmp.eq.s32.totalorder %s15, 1
    %p75 = por %p73, %p74
    %p76 = scmp.ne.s32.totalorder %s65, %s66
    %p77 = scmp.eq.s32.totalorder %s15, 0
    %p78 = por %p76, %p77
    %p79 = scmp.ne.s32.totalorder %s65, %s66
    %p80 = scmp.eq.s32.totalorder %s16, 1
    %p81 = por %p79, %p80
    %p83 = scmp.ne.s32.totalorder %s66, %s82
    %p84 = scmp.eq.s32.totalorder %s16, 0
    %p85 = por %p83, %p84
    %s87 = sadd.s32 %s86, 1
    %p90 = scmp.eq.s32.totalorder %s10, 1
    %p91 = scmp.ne.s32.totalorder %s86, %s88
    %p92 = scmp.eq.s32.totalorder %s10, 0
    %p93 = por %p91, %p92
    %p94 = scmp.ne.s32.totalorder %s86, %s88
    %p95 = scmp.eq.s32.totalorder %s15, 1
    %p96 = por %p94, %p95
    %p97 = scmp.ne.s32.totalorder %s88, %s89
    %p98 = scmp.eq.s32.totalorder %s15, 0
    %p99 = por %p97, %p98
    %p100 = scmp.ne.s32.totalorder %s88, %s89
    %p101 = scmp.eq.s32.totalorder %s16, 1
    %p102 = por %p100, %p101
    %p104 = scmp.ne.s32.totalorder %s89, %s103
    %p105 = scmp.eq.s32.totalorder %s16, 0
    %p106 = por %p104, %p105
    %s108 = sadd.s32 %s107, 1
    %p111 = scmp.eq.s32.totalorder %s10, 1
    %p112 = scmp.ne.s32.totalorder %s107, %s109
    %p113 = scmp.eq.s32.totalorder %s10, 0
    %p114 = por %p112, %p113
    %p115 = scmp.ne.s32.totalorder %s107, %s109
    %p116 = scmp.eq.s32.totalorder %s15, 1
    %p117 = por %p115, %p116
    %p118 = scmp.ne.s32.totalorder %s109, %s110
    %p119 = scmp.eq.s32.totalorder %s15, 0
    %p120 = por %p118, %p119
    %p121 = scmp.ne.s32.totalorder %s109, %s110
    %p122 = scmp.eq.s32.totalorder %s16, 1
    %p123 = por %p121, %p122
    %p125 = scmp.ne.s32.totalorder %s110, %s124
    %p126 = scmp.eq.s32.totalorder %s16, 0
    %p127 = por %p125, %p126
    %p128 = scmp.le.s32.totalorder 1, %s10
    %p129 = scmp.lt.s32.totalorder %s10, 3
    %p130 = pnand %p128, %p129
    %p131 = pneg %p130
    // Predicated region
    $region9: #{multiclass_focal_loss.1} parent=5 // pred_check
      _
    $region10: #{multiclass_focal_loss.1} parent=5 // pred_check_branch
      %133 = sbr.rel (%p130) target = $region12
    $region11: #{multiclass_focal_loss.1} parent=5 // pred_region
      %s134 = ssub.s32 %s10, 1
    $region12: #{multiclass_focal_loss.1} parent=5 // pred_fallthru
      _
    %p135 = scmp.lt.s32.totalorder %s10, 2
    // Predicated region
    $region13: #{multiclass_focal_loss.1} parent=5 // pred_check
      %p136 = pneg %p135
    $region14: #{multiclass_focal_loss.1} parent=5 // pred_check_branch
      %138 = sbr.rel (%p136) target = $region16
    $region15: #{multiclass_focal_loss.1} parent=5 // pred_region
      // Predicated region
      $region17: #{multiclass_focal_loss.1} parent=15 // pred_check
        %p139 = pneg %p44
      $region18: #{multiclass_focal_loss.1} parent=15 // pred_check_branch
        %141 = sbr.rel (%p139) target = $region20
      $region19: #{multiclass_focal_loss.1} parent=15 // pred_region
        %s142 = smul.u32 2, %s18
        %p143 = scmp.lt.s32.totalorder %s17, 1
        %s144 = scalar_select %p143, %s17, 1
        %p145 = scmp.lt.s32.totalorder %s142, 1
        %s146 = scalar_select %p145, %s142, 1
        %s147 = smul.addr %s144, 2
        %s148 = sadd.s32 %s146, %s147
        %s149 = smul.addr %s148, 4
        %s150 = scalar_lea.vmem %s0, %s149
        %s151 = smul.u32 2, %s18
      $region20: #{multiclass_focal_loss.1} parent=15 // pred_fallthru
        _
      // Predicated region
      $region21: #{multiclass_focal_loss.1} parent=15 // pred_check
        %p152 = pneg %p72
      $region22: #{multiclass_focal_loss.1} parent=15 // pred_check_branch
        %154 = sbr.rel (%p152) target = $region24
      $region23: #{multiclass_focal_loss.1} parent=15 // pred_region
        %s155 = smul.u32 2, %s18
        %p156 = scmp.lt.s32.totalorder %s17, 1
        %s157 = scalar_select %p156, %s17, 1
        %p158 = scmp.lt.s32.totalorder %s155, 1
        %s159 = scalar_select %p158, %s155, 1
        %s160 = smul.addr %s157, 2
        %s161 = sadd.s32 %s159, %s160
        %s162 = scalar_lea.vmem %s1, %s161
        %s163 = smul.u32 2, %s18
      $region24: #{multiclass_focal_loss.1} parent=15 // pred_fallthru
        _
    $region16: #{multiclass_focal_loss.1} parent=5 // pred_fallthru
      _
    %p164 = scmp.le.s32.totalorder 1, %s10
    %p165 = scmp.lt.s32.totalorder %s10, 3
    %p166 = pnand %p164, %p165
    %p167 = pneg %p166
    // Predicated region
    $region25: #{multiclass_focal_loss.1} parent=5 // pred_check
      _
    $region26: #{multiclass_focal_loss.1} parent=5 // pred_check_branch
      %169 = sbr.rel (%p166) target = $region28
    $region27: #{multiclass_focal_loss.1} parent=5 // pred_region
      %s170 = ssub.s32 %s10, 1
      %s171 = smul.u32 2, %s20
      %p172 = scmp.lt.s32.totalorder %s19, 1
      %s173 = scalar_select %p172, %s19, 1
      %p174 = scmp.lt.s32.totalorder %s171, 1
      %s175 = scalar_select %p174, %s171, 1
      %s176 = smul.addr %s173, 2
      %s177 = sadd.s32 %s175, %s176
      %s178 = smul.addr %s177, 4
      %s179 = scalar_lea.vmem %s0, %s178
      %p180 = pneg %p50
      %p181 = pneg %p47
      %s182 = smul.u32 2, %s20
      %p183 = scmp.lt.s32.totalorder %s19, 1
      %s184 = scalar_select %p183, %s19, 1
      %p185 = scmp.lt.s32.totalorder %s182, 1
      %s186 = scalar_select %p185, %s182, 1
      %s187 = smul.addr %s184, 2
      %s188 = sadd.s32 %s186, %s187
      %s189 = scalar_lea.vmem %s1, %s188
      %p190 = pneg %p78
      %p191 = pneg %p75
      %p192 = pneg %p99
      %p193 = pneg %p96
      %p194 = pneg %p120
      %p195 = pneg %p117
      %s196 = smul.u32 2, %s20
      %p197 = scmp.lt.s32.totalorder %s19, 1
      %s198 = scalar_select %p197, %s19, 1
      %p199 = scmp.lt.s32.totalorder %s196, 1
      %s200 = scalar_select %p199, %s196, 1
      %s201 = smul.addr %s198, 2
      %s202 = sadd.s32 %s200, %s201
      %s203 = smul.addr %s202, 4
      %s204 = scalar_lea.vmem %s0, %s203
      %s205 = smul.u32 2, %s20
      %s206 = smul.u32 2, %s20
      %p207 = scmp.lt.s32.totalorder %s19, 1
      %s208 = scalar_select %p207, %s19, 1
      %p209 = scmp.lt.s32.totalorder %s206, 1
      %s210 = scalar_select %p209, %s206, 1
      %s211 = smul.addr %s208, 2
      %s212 = sadd.s32 %s210, %s211
      %s213 = scalar_lea.vmem %s1, %s212
      %s214 = smul.u32 2, %s20
      %p215 = scmp.eq.s32.totalorder %s19, 0
      %p216 = scmp.eq.s32.totalorder %s20, 0
      %p217 = pnand %p215, %p216
      %p218 = pneg %p217
      // Predicated region
      $region29: #{multiclass_focal_loss.1} parent=27 // pred_check
        _
      $region30: #{multiclass_focal_loss.1} parent=27 // pred_check_branch
        %220 = sbr.rel (%p217) target = $region32
      $region31: #{multiclass_focal_loss.1} parent=27 // pred_region
        %v221 = vlaneseq
        %vm222 = vcmp.ge.s32.totalorder %v221, 0
        %vm223 = vcmp.lt.s32.totalorder %v221, 256
        %vm224 = vmand %vm222, %vm223
        %225 = vst.msk [vmem:[%s2] sm:$0x3] %vm224, 0.0
        %226 = vst.msk [vmem:[%s3] sm:$0x3] %vm224, 0.0
      $region32: #{multiclass_focal_loss.1} parent=27 // pred_fallthru
        _
      %v227 = vld [vmem:[%s204] sm:$0xff]
      %v228 = vld [vmem:[%s213] sm:$0x3]
      %v230 = vcombine.high %v227, %v227
      %vm232 = vcmask 1043456
      %v233 = vsel %vm232, %v227, -inf
      %v234 = vrot.slane %v233, 4
      %v235 = vmax.f32 %v233, %v234
      %v236 = vrot.slane %v235, 2
      %v237 = vmax.f32 %v235, %v236
      %v238 = vrot.slane %v237, 1
      %v239 = vmax.f32 %v237, %v238
      %v240 = vsel %vm232, %v230, -inf
      %v241 = vrot.slane %v240, 4
      %v242 = vmax.f32 %v240, %v241
      %v243 = vrot.slane %v242, 2
      %v244 = vmax.f32 %v242, %v243
      %v245 = vrot.slane %v244, 1
      %v246 = vmax.f32 %v244, %v245
      %v249 = vcombine.low %v239, %v246
      %v251 = vsub.f32 %v227, %v249
      %v252 = vmul.f32 %v251, 1.442695
      %v253 = vpow.pop %v252
      %v255 = vcombine.high %v253, %v253
      %v257 = vsel %vm232, %v253, 0.0
      %v258 = vrot.slane %v257, 4
      %v259 = vadd.f32 %v257, %v258
      %v260 = vrot.slane %v259, 2
      %v261 = vadd.f32 %v259, %v260
      %v262 = vrot.slane %v261, 1
      %v263 = vadd.f32 %v261, %v262
      %v264 = vsel %vm232, %v255, 0.0
      %v265 = vrot.slane %v264, 4
      %v266 = vadd.f32 %v264, %v265
      %v267 = vrot.slane %v266, 2
      %v268 = vadd.f32 %v266, %v267
      %v269 = vrot.slane %v268, 1
      %v270 = vadd.f32 %v268, %v269
      %v271 = vlog2.pop %v263
      %v272 = vmul.f32 %v271, 0.6931472
      %v273 = vlog2.pop %v270
      %v274 = vmul.f32 %v273, 0.6931472
      %v275 = vadd.f32 %v239, %v272
      %v276 = vadd.f32 %v246, %v274
      %v277 = vlaneseq
      %v278 = vshrl.u32 %v277, 7
      %v279 = vlaneseq
      %v280 = vshrl.u32 %v279, 7
      %v281 = vsub.s32 0, %v280
      %v282 = vrot.slane %v228, %v281
      %v283 = vlaneseq
      %v284 = vshrl.u32 %v283, 7
      %v285 = vsub.s32 1, %v284
      %v286 = vrot.slane %v228, %v285
      %vm287 = vcmp.eq.s32.totalorder %v278, %v282
      %vm288 = vcmp.eq.s32.totalorder %v278, %v286
      %v289 = vsel %vm287, %v227, 0.0
      %v290 = vsel %vm288, %v230, 0.0
      %v291 = vsel %vm232, %v289, 0.0
      %v292 = vrot.slane %v291, 4
      %v293 = vadd.f32 %v291, %v292
      %v294 = vrot.slane %v293, 2
      %v295 = vadd.f32 %v293, %v294
      %v296 = vrot.slane %v295, 1
      %v297 = vadd.f32 %v295, %v296
      %v298 = vsel %vm232, %v290, 0.0
      %v299 = vrot.slane %v298, 4
      %v300 = vadd.f32 %v298, %v299
      %v301 = vrot.slane %v300, 2
      %v302 = vadd.f32 %v300, %v301
      %v303 = vrot.slane %v302, 1
      %v304 = vadd.f32 %v302, %v303
      %v305 = vsub.f32 %v275, %v297
      %v306 = vsub.f32 %v276, %v304
      %s307 = smul.u32 %s20, 256
      %v308 = vlaneseq
      %v309 = vand.u32 %v308, 127
      %v310 = vadd.s32 %v309, 128
      %v311 = vstv %s307
      %v312 = vadd.s32 %v311, %v309
      %v313 = vadd.s32 %v311, %v310
      %vm314 = vcmp.ne.s32.totalorder %v228, 255
      %vm315 = vcmp.lt.s32.totalorder %v312, 256
      %vm316 = vcmp.lt.s32.totalorder %v313, 256
      %v317 = vsel %vm315, 1, 0
      %v318 = vsel %vm316, 1, 0
      %v319 = vcombine.low %v317, %v318
      %v321 = vunpack.c.l.s4 1966171168
      %v322 = vunpack.c.0.s8 %v321
      %v323 = vlaneseq
      %v324 = vshrl.u32 %v323, 7
      %v325 = vsub.s32 %v322, %v324
      %v326 = vrot.slane %v319, %v325
      %v328 = vunpack.c.l.s4 1966171168
      %v329 = vunpack.c.0.s8 %v328
      %v330 = vlaneseq
      %v331 = vshrl.u32 %v330, 7
      %v332 = vsub.s32 %v329, %v331
      %v333 = vrot.slane %v326, %v332
      %vm334 = vcmp.ne.s32.totalorder %v333, 0
      %vm335 = vmand %vm314, %vm334
      %v336 = vld [vmem:[%s2] sm:$0x3]
      %v339 = vcombine.low %v305, %v306
      %v341 = vunpack.c.l.s4 1966171168
      %v342 = vunpack.c.0.s8 %v341
      %v343 = vlaneseq
      %v344 = vshrl.u32 %v343, 7
      %v345 = vsub.s32 %v342, %v344
      %v346 = vrot.slane %v339, %v345
      %v348 = vunpack.c.l.s4 1966171168
      %v349 = vunpack.c.0.s8 %v348
      %v350 = vlaneseq
      %v351 = vshrl.u32 %v350, 7
      %v352 = vsub.s32 %v349, %v351
      %v353 = vrot.slane %v346, %v352
      %v355 = vsel %vm335, %v353, 0.0
      %v356 = vadd.f32 %v336, %v355
      %v357 = vlaneseq
      %vm358 = vcmp.ge.s32.totalorder %v357, 0
      %vm359 = vcmp.lt.s32.totalorder %v357, 256
      %vm360 = vmand %vm358, %vm359
      %361 = vst.msk [vmem:[%s2] sm:$0x3] %vm360, %v356
      %v362 = vld [vmem:[%s3] sm:$0x3]
      %v363 = vsel %vm335, 1.0, 0.0
      %v364 = vadd.f32 %v362, %v363
      %365 = vst.msk [vmem:[%s3] sm:$0x3] %vm360, %v364
      // Predicated region
      $region33: #{multiclass_focal_loss.1} parent=27 // pred_check
        %p366 = pneg %p96
      $region34: #{multiclass_focal_loss.1} parent=27 // pred_check_branch
        %368 = sbr.rel (%p366) target = $region36
      $region35: #{multiclass_focal_loss.1} parent=27 // pred_region
        _
      $region36: #{multiclass_focal_loss.1} parent=27 // pred_fallthru
        _
      // Predicated region
      $region37: #{multiclass_focal_loss.1} parent=27 // pred_check
        %p369 = pneg %p117
      $region38: #{multiclass_focal_loss.1} parent=27 // pred_check_branch
        %371 = sbr.rel (%p369) target = $region40
      $region39: #{multiclass_focal_loss.1} parent=27 // pred_region
        _
      $region40: #{multiclass_focal_loss.1} parent=27 // pred_fallthru
        _
      // Predicated region
      $region41: #{multiclass_focal_loss.1} parent=27 // pred_check
        %p372 = pneg %p96
      $region42: #{multiclass_focal_loss.1} parent=27 // pred_check_branch
        %374 = sbr.rel (%p372) target = $region44
      $region43: #{multiclass_focal_loss.1} parent=27 // pred_region
        _
      $region44: #{multiclass_focal_loss.1} parent=27 // pred_fallthru
        _
      // Predicated region
      $region45: #{multiclass_focal_loss.1} parent=27 // pred_check
        %p375 = pneg %p117
      $region46: #{multiclass_focal_loss.1} parent=27 // pred_check_branch
        %377 = sbr.rel (%p375) target = $region48
      $region47: #{multiclass_focal_loss.1} parent=27 // pred_region
        _
      $region48: #{multiclass_focal_loss.1} parent=27 // pred_fallthru
        _
    $region28: #{multiclass_focal_loss.1} parent=5 // pred_fallthru
      _
    %p378 = scmp.le.s32.totalorder 2, %s10
    // Predicated region
    $region49: #{multiclass_focal_loss.1} parent=5 // pred_check
      %p379 = pneg %p378
    $region50: #{multiclass_focal_loss.1} parent=5 // pred_check_branch
      %381 = sbr.rel (%p379) target = $region52
    $region51: #{multiclass_focal_loss.1} parent=5 // pred_region
      %s382 = ssub.s32 %s10, 2
    $region52: #{multiclass_focal_loss.1} parent=5 // pred_fallthru
      _
  $region6: #{multiclass_focal_loss.1} parent=0 // loop_footer
    %s14 = sadd.s32 1, %s10
  $region7: #{multiclass_focal_loss.1} parent=0 // loop_footer_branch
    %9 = sbr.rel target = $region3
  $region8: #{multiclass_focal_loss.1} parent=0 // loop_exit
    _

</llo_original>
